<compile_context>
chip_gen: v5e
topology: v5e:2x2
jax: 0.10.0
libtpu: 0.0.40
codegen_flags: <defaults>
</compile_context>

<pallas_src>
import functools

import jax
import jax.numpy as jnp
from jax.experimental import pallas as pl
from jax.experimental.pallas import tpu as pltpu


# ----------------------------- Pallas kernel ------------------------------- #
def _resconvnet_kernel(block_size, compute_dtype,
                       x_ref, w_in_ref, b_in_ref,
                       w1_ref, b1_ref, w2_ref, b2_ref,
                       w_out_ref, b_out_ref,
                       o_ref):
    F = w1_ref.shape[1]
    # x tile: (Cin, L_tile), length in the lane dimension.  Weights arrive
    # already in compute_dtype (cast once in the wrapper); only the streamed
    # activations are cast here.
    x = x_ref[0].astype(compute_dtype)

    # Input projection: Conv1d(input_dim -> feature_dim, k=1)  (no activation)
    h = jnp.dot(w_in_ref[...], x,
                preferred_element_type=jnp.float32) + b_in_ref[...]   # (F, Lt) f32

    # ResConvBlock: out = relu(conv1(h)); h = h + relu(conv2(out))
    # TODO(synk): on v5e, if profiling shows VALU (not MXU) saturating, carry h
    # in bf16 between blocks to halve per-layer cast volume.
    def res_block(i, h):
        t = jnp.maximum(
            jnp.dot(w1_ref[i], h.astype(compute_dtype),
                    preferred_element_type=jnp.float32) + b1_ref[i],
            0.0)
        return h + jnp.maximum(
            jnp.dot(w2_ref[i], t.astype(compute_dtype),
                    preferred_element_type=jnp.float32) + b2_ref[i],
            0.0)

    # Static unroll when per-iteration matmuls are small (F<=256) or the stack
    # is shallow; rolled loop only when MXU time dominates and depth is large.
    if block_size <= (8 if F <= 256 else 4):
        for i in range(block_size):
            h = res_block(i, h)
    else:
        h = jax.lax.fori_loop(0, block_size, res_block, h, unroll=2)

    # Output projection: Conv1d(feature_dim -> output_dim, k=1)  (no activation)
    y = jnp.dot(w_out_ref[...], h.astype(compute_dtype),
                preferred_element_type=jnp.float32) + b_out_ref[...]
    o_ref[0] = y.astype(o_ref.dtype)


# ------------------------------- Wrapper ------------------------------------ #
def resconvnet_forward(x, params, *, block_size, tile_l=512,
                       compute_dtype=jnp.bfloat16):
    """x: (N, C_in, L) float32 (PyTorch Conv1d layout). Returns (N, C_out, L).

    compute_dtype=jnp.bfloat16 (default) runs the MXU matmuls in bf16 with f32
    accumulation; pass jnp.float32 for bit-accurate comparison vs. the reference.
    """
    (w_in, b_in, w1s, b1s, w2s, b2s, w_out, b_out) = params
    N, Cin, L = x.shape
    F = w_in.shape[0]
    Cout = w_out.shape[0]

    # Cast weights ONCE on the host/XLA side: halves resident weight VMEM and
    # weight HBM traffic, removes per-grid-step VPU recasts.  Biases stay f32
    # (they are added to the f32 accumulator).
    cd = jnp.dtype(compute_dtype)
    w_in = w_in.astype(cd)
    w1s = w1s.astype(cd)
    w2s = w2s.astype(cd)
    w_out = w_out.astype(cd)

    # ---------------- VMEM accounting (true tiled sizes) ------------------- #
    def _tile_bytes(shape, itemsize):
        # Last dim pads to 128 lanes, second-to-last to 8 sublanes in VMEM.
        s = list(shape)
        s[-1] = -(-s[-1] // 128) * 128
        if len(s) >= 2:
            s[-2] = -(-s[-2] // 8) * 8
        n = 1
        for d in s:
            n *= d
        return n * itemsize

    rup8 = lambda v: -(-v // 8) * 8
    wt = cd.itemsize
    # Constant-index weights/biases: single VMEM buffer (pl.Buffered(1)).
    # Note the (F,1)/(bs,F,1) biases really occupy F x 128 lanes in VMEM.
    weight_bytes = (
        _tile_bytes((F, Cin), wt) + _tile_bytes((F, 1), 4)
        + 2 * (_tile_bytes((block_size, F, F), wt) + _tile_bytes((block_size, F, 1), 4))
        + _tile_bytes((Cout, F), wt) + _tile_bytes((Cout, 1), 4))
    # TODO(synk): for production F with large block_size, pack all biases into
    # one lane-dense (2*bs+2, F) array to avoid the 128x lane blow-up entirely.

    # Generation-aware VMEM budget: ~3/4 of physical capacity
    # (96 MiB on v5e/v6e's 128 MiB, 48 MiB on v7x's 64 MiB).
    try:
        vmem_cap = int(pltpu.get_tpu_info().vmem_capacity_bytes)
    except Exception:  # conservative fallback
        vmem_cap = 64 * 2**20
    budget = (vmem_cap * 3) // 4

    # ---------------- length-tile (lane) selection ------------------------- #
    headroom = 2 * 2**20
    # Per unit tile_l (f32): double-buffered x + out tiles, plus live h/t copies.
    per_l_bytes = 4 * (2 * rup8(Cin) + 2 * rup8(Cout) + 4 * rup8(F))
    avail = max(budget - weight_bytes - headroom, 128 * per_l_bytes)
    max_tl = max(128, (avail // per_l_bytes) // 128 * 128)

    desired = max(tile_l, 128)
    if F <= 128:
        # Small-F regime is per-step-overhead / DMA bound: use big lane tiles.
        desired = max(desired, 2048)
    desired = min(desired, max_tl)
    desired = (desired // 256) * 256 if desired >= 256 else 128  # v6e/v7x MXU 2x256^2

    if L <= desired:
        # Whole length as one lane tile -> no wrapper-side padding ever.
        tile_l, L_pad, nt = L, L, 1
    elif L % 128 == 0:
        # Pick the largest 128-multiple <= desired that divides L (prefer 256-mult),
        # so x is never padded/copied in the wrapper.
        cands = [t for t in range(desired, 127, -128) if L % t == 0]
        pref = [t for t in cands if t % 256 == 0]
        tile_l = (pref or cands)[0]
        L_pad, nt = L, L // tile_l
    else:
        # TODO(synk): handle the ragged tail with a masked final block instead of
        # materializing a padded copy of x.
        tile_l = desired
        L_pad = -(-L // tile_l) * tile_l
        nt = L_pad // tile_l

    # v7x has 2 TensorCores: avoid a single-step grid when we can split evenly.
    if N * nt == 1 and L >= 256 and L % 256 == 0:
        tile_l, nt = L // 2, 2

    if L_pad != L:
        x = jnp.pad(x, ((0, 0), (0, 0), (0, L_pad - L)))

    grid = (N, nt)

    blk_bytes = (weight_bytes
                 + 2 * _tile_bytes((1, Cin, tile_l), 4)     # x tile (double-buffered)
                 + 2 * _tile_bytes((1, Cout, tile_l), 4)    # out tile (double-buffered)
                 + 4 * _tile_bytes((F, tile_l), 4)          # live h/t activations
                 + headroom)
    vmem_limit = int(min(budget, max(32 * 2**20, blk_bytes)))

    # TODO(synk): for F>=1024 with block_size>=8 on v7x, stream res-block weights
    # over an extra innermost "arbitrary" grid axis (h in VMEM scratch, input/output
    # projections gated with pl.when) instead of keeping the full stack resident.

    single = pl.Buffered(1)  # constant index_map -> one VMEM buffer, DMA'd once

    out = pl.pallas_call(
        functools.partial(_resconvnet_kernel, block_size, compute_dtype),
        out_shape=jax.ShapeDtypeStruct((N, Cout, L_pad), jnp.float32),
        grid=grid,
        in_specs=[
            pl.BlockSpec((1, Cin, tile_l), lambda n, lt: (n, 0, lt)),        # x
            pl.BlockSpec((F, Cin), lambda n, lt: (0, 0),
                         pipeline_mode=single),                              # w_in
            pl.BlockSpec((F, 1), lambda n, lt: (0, 0),
                         pipeline_mode=single),                              # b_in
            pl.BlockSpec((block_size, F, F), lambda n, lt: (0, 0, 0),
                         pipeline_mode=single),                              # w1 stack
            pl.BlockSpec((block_size, F, 1), lambda n, lt: (0, 0, 0),
                         pipeline_mode=single),                              # b1 stack
            pl.BlockSpec((block_size, F, F), lambda n, lt: (0, 0, 0),
                         pipeline_mode=single),                              # w2 stack
            pl.BlockSpec((block_size, F, 1), lambda n, lt: (0, 0, 0),
                         pipeline_mode=single),                              # b2 stack
            pl.BlockSpec((Cout, F), lambda n, lt: (0, 0),
                         pipeline_mode=single),                              # w_out
            pl.BlockSpec((Cout, 1), lambda n, lt: (0, 0),
                         pipeline_mode=single),                              # b_out
        ],
        out_specs=pl.BlockSpec((1, Cout, tile_l), lambda n, lt: (n, 0, lt)),
        compiler_params=pltpu.CompilerParams(
            dimension_semantics=("parallel", "parallel"),
            vmem_limit_bytes=vmem_limit),
    )(x, w_in, b_in, w1s, b1s, w2s, b2s, w_out, b_out)

    return out[:, :, :L]


# --------------------------- Parameter init --------------------------------- #
def init_params(key, input_dim, output_dim, feature_dim, block_size):
    """Deterministic init mimicking PyTorch Conv1d default (uniform +-1/sqrt(fan_in)).
    Weights stored as (out, in) matrices (= PyTorch conv weight[:, :, 0]); biases
    as (out, 1) columns so they broadcast over the length/lane dimension."""
    def conv1x1(key, fan_in, fan_out):
        kw, kb = jax.random.split(key)
        bound = 1.0 / jnp.sqrt(fan_in)
        w = jax.random.uniform(kw, (fan_out, fan_in), jnp.float32, -bound, bound)
        b = jax.random.uniform(kb, (fan_out, 1), jnp.float32, -bound, bound)
        return w, b

    keys = jax.random.split(key, 2 + 2 * block_size)
    w_in, b_in = conv1x1(keys[0], input_dim, feature_dim)
    w1s, b1s, w2s, b2s = [], [], [], []
    for i in range(block_size):
        w1, b1 = conv1x1(keys[1 + 2 * i], feature_dim, feature_dim)
        w2, b2 = conv1x1(keys[2 + 2 * i], feature_dim, feature_dim)
        w1s.append(w1); b1s.append(b1); w2s.append(w2); b2s.append(b2)
    w_out, b_out = conv1x1(keys[-1], feature_dim, output_dim)
    return (w_in, b_in,
            jnp.stack(w1s), jnp.stack(b1s),
            jnp.stack(w2s), jnp.stack(b2s),
            w_out, b_out)


# ------------------------- Pure-JAX reference -------------------------------- #
def resconvnet_ref(x, params, *, block_size):
    (w_in, b_in, w1s, b1s, w2s, b2s, w_out, b_out) = params
    h = jnp.einsum('fc,ncl->nfl', w_in, x) + b_in[None]
    for i in range(block_size):
        t = jax.nn.relu(jnp.einsum('gf,nfl->ngl', w1s[i], h) + b1s[i][None])
        h = h + jax.nn.relu(jnp.einsum('fg,ngl->nfl', w2s[i], t) + b2s[i][None])
    return jnp.einsum('of,nfl->nol', w_out, h) + b_out[None]


if __name__ == "__main__":
    # Small shapes consistent with the module: Conv1d input is (N, C, L).
    N, input_dim, L = 2, 4, 16
    output_dim, feature_dim, block_size = 6, 32, 2

    key = jax.random.PRNGKey(0)
    kx, kp = jax.random.split(key)
    x = jax.random.normal(kx, (N, input_dim, L), jnp.float32)
    params = init_params(kp, input_dim, output_dim, feature_dim, block_size)

    ref = resconvnet_ref(x, params, block_size=block_size)

    # Bit-accurate f32 path (strict tolerance).
    out_f32 = jax.block_until_ready(
        resconvnet_forward(x, params, block_size=block_size,
                           compute_dtype=jnp.float32))
    assert out_f32.shape == (N, output_dim, L), out_f32.shape
    assert jnp.allclose(out_f32, ref, atol=1e-5, rtol=1e-5), \
        float(jnp.max(jnp.abs(out_f32 - ref)))

    # Production default path: bf16 MXU inputs, f32 accumulation (loose tolerance).
    out_bf16 = jax.block_until_ready(
        resconvnet_forward(x, params, block_size=block_size))
    assert out_bf16.shape == (N, output_dim, L), out_bf16.shape
    assert jnp.allclose(out_bf16, ref, atol=5e-2, rtol=5e-2), \
        float(jnp.max(jnp.abs(out_bf16 - ref)))

    print("KERNEL_OK")
</pallas_src>

<mosaic_0001>
module attributes {stable_mosaic.version = 11 : i64} {
  func.func @_resconvnet_kernel(%arg0: i32, %arg1: i32, %arg2: memref<1x4x16xf32, #tpu.memory_space<vmem>>, %arg3: memref<32x4xf32, #tpu.memory_space<vmem>>, %arg4: memref<32x1xf32, #tpu.memory_space<vmem>>, %arg5: memref<2x32x32xf32, #tpu.memory_space<vmem>>, %arg6: memref<2x32x1xf32, #tpu.memory_space<vmem>>, %arg7: memref<2x32x32xf32, #tpu.memory_space<vmem>>, %arg8: memref<2x32x1xf32, #tpu.memory_space<vmem>>, %arg9: memref<6x32xf32, #tpu.memory_space<vmem>>, %arg10: memref<6x1xf32, #tpu.memory_space<vmem>>, %arg11: memref<1x6x16xf32, #tpu.memory_space<vmem>>) attributes {dimension_semantics = [#tpu.dimension_semantics<parallel>, #tpu.dimension_semantics<parallel>], iteration_bounds = array<i64: 2, 1>, scalar_prefetch = 0 : i64, scratch_operands = 0 : i64, tpu.core_type = #tpu.core_type<tc>, window_params = [{transform_indices = @transform_0, window_bounds = array<i64: 1, 4, 16>}, {pipeline_mode = #tpu.pipeline_mode<synchronous>, transform_indices = @transform_1, window_bounds = array<i64: 32, 4>}, {pipeline_mode = #tpu.pipeline_mode<synchronous>, transform_indices = @transform_2, window_bounds = array<i64: 32, 1>}, {pipeline_mode = #tpu.pipeline_mode<synchronous>, transform_indices = @transform_3, window_bounds = array<i64: 2, 32, 32>}, {pipeline_mode = #tpu.pipeline_mode<synchronous>, transform_indices = @transform_4, window_bounds = array<i64: 2, 32, 1>}, {pipeline_mode = #tpu.pipeline_mode<synchronous>, transform_indices = @transform_5, window_bounds = array<i64: 2, 32, 32>}, {pipeline_mode = #tpu.pipeline_mode<synchronous>, transform_indices = @transform_6, window_bounds = array<i64: 2, 32, 1>}, {pipeline_mode = #tpu.pipeline_mode<synchronous>, transform_indices = @transform_7, window_bounds = array<i64: 6, 32>}, {pipeline_mode = #tpu.pipeline_mode<synchronous>, transform_indices = @transform_8, window_bounds = array<i64: 6, 1>}, {transform_indices = @transform_9, window_bounds = array<i64: 1, 6, 16>}]} {
    %c0 = arith.constant 0 : index
    %c0_0 = arith.constant 0 : index
    %c0_1 = arith.constant 0 : index
    %0 = vector.load %arg2[%c0, %c0_0, %c0_1] : memref<1x4x16xf32, #tpu.memory_space<vmem>>, vector<1x4x16xf32>
    %1 = vector.shape_cast %0 : vector<1x4x16xf32> to vector<4x16xf32>
    %c0_2 = arith.constant 0 : index
    %c0_3 = arith.constant 0 : index
    %2 = vector.load %arg3[%c0_2, %c0_3] : memref<32x4xf32, #tpu.memory_space<vmem>>, vector<32x4xf32>
    %cst = arith.constant dense<0.000000e+00> : vector<32x16xf32>
    %3 = tpu.matmul %2, %1, %cst {dimension_numbers = #tpu.dot_dimension_numbers<[1], [0], [0], [1], [0, 0, 1, 1], [], []>} : vector<32x4xf32>, vector<4x16xf32>, vector<32x16xf32> -> vector<32x16xf32>
    %c0_4 = arith.constant 0 : index
    %c0_5 = arith.constant 0 : index
    %4 = vector.load %arg4[%c0_4, %c0_5] : memref<32x1xf32, #tpu.memory_space<vmem>>, vector<32x1xf32>
    %5 = vector.broadcast %4 : vector<32x1xf32> to vector<32x16xf32>
    %6 = arith.addf %3, %5 : vector<32x16xf32>
    %c0_6 = arith.constant 0 : index
    %c0_7 = arith.constant 0 : index
    %c0_8 = arith.constant 0 : index
    %7 = vector.load %arg5[%c0_6, %c0_7, %c0_8] : memref<2x32x32xf32, #tpu.memory_space<vmem>>, vector<1x32x32xf32>
    %8 = vector.shape_cast %7 : vector<1x32x32xf32> to vector<32x32xf32>
    %cst_9 = arith.constant dense<0.000000e+00> : vector<32x16xf32>
    %9 = tpu.matmul %8, %6, %cst_9 {dimension_numbers = #tpu.dot_dimension_numbers<[1], [0], [0], [1], [0, 0, 1, 1], [], []>} : vector<32x32xf32>, vector<32x16xf32>, vector<32x16xf32> -> vector<32x16xf32>
    %c0_10 = arith.constant 0 : index
    %c0_11 = arith.constant 0 : index
    %c0_12 = arith.constant 0 : index
    %10 = vector.load %arg6[%c0_10, %c0_11, %c0_12] : memref<2x32x1xf32, #tpu.memory_space<vmem>>, vector<1x32x1xf32>
    %11 = vector.shape_cast %10 : vector<1x32x1xf32> to vector<32x1xf32>
    %12 = vector.broadcast %11 : vector<32x1xf32> to vector<32x16xf32>
    %13 = arith.addf %9, %12 : vector<32x16xf32>
    %cst_13 = arith.constant 0.000000e+00 : f32
    %14 = vector.broadcast %cst_13 : f32 to vector<32x16xf32>
    %15 = arith.maximumf %13, %14 : vector<32x16xf32>
    %c0_14 = arith.constant 0 : index
    %c0_15 = arith.constant 0 : index
    %c0_16 = arith.constant 0 : index
    %16 = vector.load %arg7[%c0_14, %c0_15, %c0_16] : memref<2x32x32xf32, #tpu.memory_space<vmem>>, vector<1x32x32xf32>
    %17 = vector.shape_cast %16 : vector<1x32x32xf32> to vector<32x32xf32>
    %cst_17 = arith.constant dense<0.000000e+00> : vector<32x16xf32>
    %18 = tpu.matmul %17, %15, %cst_17 {dimension_numbers = #tpu.dot_dimension_numbers<[1], [0], [0], [1], [0, 0, 1, 1], [], []>} : vector<32x32xf32>, vector<32x16xf32>, vector<32x16xf32> -> vector<32x16xf32>
    %c0_18 = arith.constant 0 : index
    %c0_19 = arith.constant 0 : index
    %c0_20 = arith.constant 0 : index
    %19 = vector.load %arg8[%c0_18, %c0_19, %c0_20] : memref<2x32x1xf32, #tpu.memory_space<vmem>>, vector<1x32x1xf32>
    %20 = vector.shape_cast %19 : vector<1x32x1xf32> to vector<32x1xf32>
    %21 = vector.broadcast %20 : vector<32x1xf32> to vector<32x16xf32>
    %22 = arith.addf %18, %21 : vector<32x16xf32>
    %cst_21 = arith.constant 0.000000e+00 : f32
    %23 = vector.broadcast %cst_21 : f32 to vector<32x16xf32>
    %24 = arith.maximumf %22, %23 : vector<32x16xf32>
    %25 = arith.addf %6, %24 : vector<32x16xf32>
    %c1 = arith.constant 1 : index
    %c0_22 = arith.constant 0 : index
    %c0_23 = arith.constant 0 : index
    %26 = vector.load %arg5[%c1, %c0_22, %c0_23] : memref<2x32x32xf32, #tpu.memory_space<vmem>>, vector<1x32x32xf32>
    %27 = vector.shape_cast %26 : vector<1x32x32xf32> to vector<32x32xf32>
    %cst_24 = arith.constant dense<0.000000e+00> : vector<32x16xf32>
    %28 = tpu.matmul %27, %25, %cst_24 {dimension_numbers = #tpu.dot_dimension_numbers<[1], [0], [0], [1], [0, 0, 1, 1], [], []>} : vector<32x32xf32>, vector<32x16xf32>, vector<32x16xf32> -> vector<32x16xf32>
    %c1_25 = arith.constant 1 : index
    %c0_26 = arith.constant 0 : index
    %c0_27 = arith.constant 0 : index
    %29 = vector.load %arg6[%c1_25, %c0_26, %c0_27] : memref<2x32x1xf32, #tpu.memory_space<vmem>>, vector<1x32x1xf32>
    %30 = vector.shape_cast %29 : vector<1x32x1xf32> to vector<32x1xf32>
    %31 = vector.broadcast %30 : vector<32x1xf32> to vector<32x16xf32>
    %32 = arith.addf %28, %31 : vector<32x16xf32>
    %cst_28 = arith.constant 0.000000e+00 : f32
    %33 = vector.broadcast %cst_28 : f32 to vector<32x16xf32>
    %34 = arith.maximumf %32, %33 : vector<32x16xf32>
    %c1_29 = arith.constant 1 : index
    %c0_30 = arith.constant 0 : index
    %c0_31 = arith.constant 0 : index
    %35 = vector.load %arg7[%c1_29, %c0_30, %c0_31] : memref<2x32x32xf32, #tpu.memory_space<vmem>>, vector<1x32x32xf32>
    %36 = vector.shape_cast %35 : vector<1x32x32xf32> to vector<32x32xf32>
    %cst_32 = arith.constant dense<0.000000e+00> : vector<32x16xf32>
    %37 = tpu.matmul %36, %34, %cst_32 {dimension_numbers = #tpu.dot_dimension_numbers<[1], [0], [0], [1], [0, 0, 1, 1], [], []>} : vector<32x32xf32>, vector<32x16xf32>, vector<32x16xf32> -> vector<32x16xf32>
    %c1_33 = arith.constant 1 : index
    %c0_34 = arith.constant 0 : index
    %c0_35 = arith.constant 0 : index
    %38 = vector.load %arg8[%c1_33, %c0_34, %c0_35] : memref<2x32x1xf32, #tpu.memory_space<vmem>>, vector<1x32x1xf32>
    %39 = vector.shape_cast %38 : vector<1x32x1xf32> to vector<32x1xf32>
    %40 = vector.broadcast %39 : vector<32x1xf32> to vector<32x16xf32>
    %41 = arith.addf %37, %40 : vector<32x16xf32>
    %cst_36 = arith.constant 0.000000e+00 : f32
    %42 = vector.broadcast %cst_36 : f32 to vector<32x16xf32>
    %43 = arith.maximumf %41, %42 : vector<32x16xf32>
    %44 = arith.addf %25, %43 : vector<32x16xf32>
    %c0_37 = arith.constant 0 : index
    %c0_38 = arith.constant 0 : index
    %45 = vector.load %arg9[%c0_37, %c0_38] : memref<6x32xf32, #tpu.memory_space<vmem>>, vector<6x32xf32>
    %cst_39 = arith.constant dense<0.000000e+00> : vector<6x16xf32>
    %46 = tpu.matmul %45, %44, %cst_39 {dimension_numbers = #tpu.dot_dimension_numbers<[1], [0], [0], [1], [0, 0, 1, 1], [], []>} : vector<6x32xf32>, vector<32x16xf32>, vector<6x16xf32> -> vector<6x16xf32>
    %c0_40 = arith.constant 0 : index
    %c0_41 = arith.constant 0 : index
    %47 = vector.load %arg10[%c0_40, %c0_41] : memref<6x1xf32, #tpu.memory_space<vmem>>, vector<6x1xf32>
    %48 = vector.broadcast %47 : vector<6x1xf32> to vector<6x16xf32>
    %49 = arith.addf %46, %48 : vector<6x16xf32>
    %c0_42 = arith.constant 0 : index
    %c0_43 = arith.constant 0 : index
    %c0_44 = arith.constant 0 : index
    %50 = vector.load %arg11[%c0_42, %c0_43, %c0_44] : memref<1x6x16xf32, #tpu.memory_space<vmem>>, vector<1x6x16xf32>
    %51 = vector.shape_cast %50 : vector<1x6x16xf32> to vector<6x16xf32>
    %52 = vector.shape_cast %49 : vector<6x16xf32> to vector<1x6x16xf32>
    tpu.vector_store %arg11[%c0_42, %c0_43, %c0_44], %52 {strides = array<i32>} : memref<1x6x16xf32, #tpu.memory_space<vmem>>, vector<1x6x16xf32>,
    return
  }
  func.func @transform_0(%arg0: i32, %arg1: i32) -> (i32, i32, i32) {
    %c0_i32 = arith.constant 0 : i32
    %c0_i32_0 = arith.constant 0 : i32
    return %arg0, %c0_i32, %arg1 : i32, i32, i32
  }
  func.func @transform_1(%arg0: i32, %arg1: i32) -> (i32, i32) {
    %c0_i32 = arith.constant 0 : i32
    %c0_i32_0 = arith.constant 0 : i32
    %c0_i32_1 = arith.constant 0 : i32
    return %c0_i32, %c0_i32_0 : i32, i32
  }
  func.func @transform_2(%arg0: i32, %arg1: i32) -> (i32, i32) {
    %c0_i32 = arith.constant 0 : i32
    %c0_i32_0 = arith.constant 0 : i32
    %c0_i32_1 = arith.constant 0 : i32
    return %c0_i32, %c0_i32_0 : i32, i32
  }
  func.func @transform_3(%arg0: i32, %arg1: i32) -> (i32, i32, i32) {
    %c0_i32 = arith.constant 0 : i32
    %c0_i32_0 = arith.constant 0 : i32
    %c0_i32_1 = arith.constant 0 : i32
    %c0_i32_2 = arith.constant 0 : i32
    return %c0_i32, %c0_i32_0, %c0_i32_1 : i32, i32, i32
  }
  func.func @transform_4(%arg0: i32, %arg1: i32) -> (i32, i32, i32) {
    %c0_i32 = arith.constant 0 : i32
    %c0_i32_0 = arith.constant 0 : i32
    %c0_i32_1 = arith.constant 0 : i32
    %c0_i32_2 = arith.constant 0 : i32
    return %c0_i32, %c0_i32_0, %c0_i32_1 : i32, i32, i32
  }
  func.func @transform_5(%arg0: i32, %arg1: i32) -> (i32, i32, i32) {
    %c0_i32 = arith.constant 0 : i32
    %c0_i32_0 = arith.constant 0 : i32
    %c0_i32_1 = arith.constant 0 : i32
    %c0_i32_2 = arith.constant 0 : i32
    return %c0_i32, %c0_i32_0, %c0_i32_1 : i32, i32, i32
  }
  func.func @transform_6(%arg0: i32, %arg1: i32) -> (i32, i32, i32) {
    %c0_i32 = arith.constant 0 : i32
    %c0_i32_0 = arith.constant 0 : i32
    %c0_i32_1 = arith.constant 0 : i32
    %c0_i32_2 = arith.constant 0 : i32
    return %c0_i32, %c0_i32_0, %c0_i32_1 : i32, i32, i32
  }
  func.func @transform_7(%arg0: i32, %arg1: i32) -> (i32, i32) {
    %c0_i32 = arith.constant 0 : i32
    %c0_i32_0 = arith.constant 0 : i32
    %c0_i32_1 = arith.constant 0 : i32
    return %c0_i32, %c0_i32_0 : i32, i32
  }
  func.func @transform_8(%arg0: i32, %arg1: i32) -> (i32, i32) {
    %c0_i32 = arith.constant 0 : i32
    %c0_i32_0 = arith.constant 0 : i32
    %c0_i32_1 = arith.constant 0 : i32
    return %c0_i32, %c0_i32_0 : i32, i32
  }
  func.func @transform_9(%arg0: i32, %arg1: i32) -> (i32, i32, i32) {
    %c0_i32 = arith.constant 0 : i32
    %c0_i32_0 = arith.constant 0 : i32
    return %arg0, %c0_i32, %arg1 : i32, i32, i32
  }
}

</mosaic_0001>

<llo_original>
// kernel: tpu_custom_call.1
$region0: #{tpu_custom_call.1}
  #allocation0 [shape = 'u32[]', space=smem, size = 0x4, offset = 0x4, fixed_abs, tag = 'smem constant byte address 0x4 - core index']
  #allocation1 [shape = 'u32[72,128]{1,0:T(1,128)}', space=vmem, size = 0x9000, scoped, tag = 'internal scratch']
  %s0 = inlined_call_operand.vmem [shape: f32[2,4,16], index: 0, kind: input, shape index: {}]
  %s1 = inlined_call_operand.vmem [shape: f32[32,4], index: 1, kind: input, shape index: {}]
  %s2 = inlined_call_operand.vmem [shape: f32[32,1], index: 2, kind: input, shape index: {}]
  %s3 = inlined_call_operand.vmem [shape: f32[2,32,32], index: 3, kind: input, shape index: {}]
  %s4 = inlined_call_operand.vmem [shape: f32[2,32,1], index: 4, kind: input, shape index: {}]
  %s5 = inlined_call_operand.vmem [shape: f32[2,32,32], index: 5, kind: input, shape index: {}]
  %s6 = inlined_call_operand.vmem [shape: f32[2,32,1], index: 6, kind: input, shape index: {}]
  %s7 = inlined_call_operand.vmem [shape: f32[6,32], index: 7, kind: input, shape index: {}]
  %s8 = inlined_call_operand.vmem [shape: f32[6,1], index: 8, kind: input, shape index: {}]
  %s9 = inlined_call_operand.vmem [shape: f32[2,6,16], index: 9, kind: output, shape index: {}]
  %s10 = sld [smem:[#allocation0]]
  $region69: #{tpu_custom_call.1} parent=0
    _
  %s12 = ssub.s32 1, %s10
  %s13 = scalar_select 0, %s12, %s10
  loop: start=0, step=1, limit=4
  $region2: #{tpu_custom_call.1} parent=0 // loop_pre_header
    _
  $region3: #{tpu_custom_call.1} parent=0 // loop_header
    %s15 = sphi 0, %s19
    %p16 = scmp.ge.s32.totalorder %s15, 4
    %s22 = sphi 0, %s34
    %s23 = sphi 0, %s30
    %s24 = sphi 0, %s22
    %s25 = sphi 0, %s23
    %s26 = sphi 0, %s24
    %s27 = sphi 0, %s25
    %s39 = sphi 0, %s41
    %s42 = sphi 0, %s39
    %s43 = sphi 0, %s42
    %s59 = sphi 0, %s43
    %s63 = sphi 0, %s63
    %s65 = sphi 0, %s63
    %s66 = sphi 0, %s65
    %s80 = sphi 0, %s66
    %s84 = sphi 0, %s84
    %s86 = sphi 0, %s84
    %s87 = sphi 0, %s86
    %s101 = sphi 0, %s87
    %s105 = sphi 0, %s105
    %s107 = sphi 0, %s105
    %s108 = sphi 0, %s107
    %s122 = sphi 0, %s108
    %s126 = sphi 0, %s126
    %s128 = sphi 0, %s126
    %s129 = sphi 0, %s128
    %s143 = sphi 0, %s129
    %s147 = sphi 0, %s147
    %s149 = sphi 0, %s147
    %s150 = sphi 0, %s149
    %s164 = sphi 0, %s150
    %s168 = sphi 0, %s168
    %s170 = sphi 0, %s168
    %s171 = sphi 0, %s170
    %s185 = sphi 0, %s171
    %s189 = sphi 0, %s189
    %s191 = sphi 0, %s189
    %s192 = sphi 0, %s191
    %s206 = sphi 0, %s192
    %s210 = sphi 0, %s210
    %s212 = sphi 0, %s210
    %s213 = sphi 0, %s212
    %s227 = sphi 0, %s213
    %s235 = sphi 0, %s237
    %s238 = sphi 0, %s235
    %s239 = sphi 0, %s238
    %s255 = sphi 0, %s239
  $region4: #{tpu_custom_call.1} parent=0 // loop_header_branch
    %18 = sbr.rel (%p16) target = $region8
  $region5: #{tpu_custom_call.1} parent=0 // loop_body
    %s20 = ssub.s32 %s15, 1
    %s21 = ssub.s32 %s15, 2
    %s28 = sadd.s32 1, %s23
    %p29 = scmp.ge.s32.totalorder %s28, 1
    %s30 = scalar_select %p29, 0, %s28
    %s31 = sadd.s32 1, %s22
    %s32 = scalar_select %p29, %s31, %s22
    %p33 = scmp.ge.s32.totalorder %s32, 2
    %s34 = scalar_select %p33, 0, %s32
    %s35 = ssub.s32 %s22, %s34
    %s36 = ssub.s32 %s23, %s30
    %s37 = sor.u32 %s35, %s36
    %p38 = scmp.eq.s32.totalorder %s37, 0
    %s40 = sadd.s32 %s39, 1
    %s41 = scalar_select %p38, %s39, %s40
    %p44 = pneg %p38
    %p45 = scmp.eq.s32.totalorder %s15, 1
    %p46 = por %p44, %p45
    %p47 = scmp.ne.s32.totalorder %s39, %s42
    %p48 = scmp.eq.s32.totalorder %s15, 0
    %p49 = por %p47, %p48
    %p50 = scmp.ne.s32.totalorder %s39, %s42
    %p51 = scmp.eq.s32.totalorder %s20, 1
    %p52 = por %p50, %p51
    %p53 = scmp.ne.s32.totalorder %s42, %s43
    %p54 = scmp.eq.s32.totalorder %s20, 0
    %p55 = por %p53, %p54
    %p56 = scmp.ne.s32.totalorder %s42, %s43
    %p57 = scmp.eq.s32.totalorder %s21, 1
    %p58 = por %p56, %p57
    %p60 = scmp.ne.s32.totalorder %s43, %s59
    %p61 = scmp.eq.s32.totalorder %s21, 0
    %p62 = por %p60, %p61
    %s64 = sadd.s32 %s63, 1
    %p67 = scmp.eq.s32.totalorder %s15, 1
    %p68 = scmp.ne.s32.totalorder %s63, %s65
    %p69 = scmp.eq.s32.totalorder %s15, 0
    %p70 = por %p68, %p69
    %p71 = scmp.ne.s32.totalorder %s63, %s65
    %p72 = scmp.eq.s32.totalorder %s20, 1
    %p73 = por %p71, %p72
    %p74 = scmp.ne.s32.totalorder %s65, %s66
    %p75 = scmp.eq.s32.totalorder %s20, 0
    %p76 = por %p74, %p75
    %p77 = scmp.ne.s32.totalorder %s65, %s66
    %p78 = scmp.eq.s32.totalorder %s21, 1
    %p79 = por %p77, %p78
    %p81 = scmp.ne.s32.totalorder %s66, %s80
    %p82 = scmp.eq.s32.totalorder %s21, 0
    %p83 = por %p81, %p82
    %s85 = sadd.s32 %s84, 1
    %p88 = scmp.eq.s32.totalorder %s15, 1
    %p89 = scmp.ne.s32.totalorder %s84, %s86
    %p90 = scmp.eq.s32.totalorder %s15, 0
    %p91 = por %p89, %p90
    %p92 = scmp.ne.s32.totalorder %s84, %s86
    %p93 = scmp.eq.s32.totalorder %s20, 1
    %p94 = por %p92, %p93
    %p95 = scmp.ne.s32.totalorder %s86, %s87
    %p96 = scmp.eq.s32.totalorder %s20, 0
    %p97 = por %p95, %p96
    %p98 = scmp.ne.s32.totalorder %s86, %s87
    %p99 = scmp.eq.s32.totalorder %s21, 1
    %p100 = por %p98, %p99
    %p102 = scmp.ne.s32.totalorder %s87, %s101
    %p103 = scmp.eq.s32.totalorder %s21, 0
    %p104 = por %p102, %p103
    %s106 = sadd.s32 %s105, 1
    %p109 = scmp.eq.s32.totalorder %s15, 1
    %p110 = scmp.ne.s32.totalorder %s105, %s107
    %p111 = scmp.eq.s32.totalorder %s15, 0
    %p112 = por %p110, %p111
    %p113 = scmp.ne.s32.totalorder %s105, %s107
    %p114 = scmp.eq.s32.totalorder %s20, 1
    %p115 = por %p113, %p114
    %p116 = scmp.ne.s32.totalorder %s107, %s108
    %p117 = scmp.eq.s32.totalorder %s20, 0
    %p118 = por %p116, %p117
    %p119 = scmp.ne.s32.totalorder %s107, %s108
    %p120 = scmp.eq.s32.totalorder %s21, 1
    %p121 = por %p119, %p120
    %p123 = scmp.ne.s32.totalorder %s108, %s122
    %p124 = scmp.eq.s32.totalorder %s21, 0
    %p125 = por %p123, %p124
    %s127 = sadd.s32 %s126, 1
    %p130 = scmp.eq.s32.totalorder %s15, 1
    %p131 = scmp.ne.s32.totalorder %s126, %s128
    %p132 = scmp.eq.s32.totalorder %s15, 0
    %p133 = por %p131, %p132
    %p134 = scmp.ne.s32.totalorder %s126, %s128
    %p135 = scmp.eq.s32.totalorder %s20, 1
    %p136 = por %p134, %p135
    %p137 = scmp.ne.s32.totalorder %s128, %s129
    %p138 = scmp.eq.s32.totalorder %s20, 0
    %p139 = por %p137, %p138
    %p140 = scmp.ne.s32.totalorder %s128, %s129
    %p141 = scmp.eq.s32.totalorder %s21, 1
    %p142 = por %p140, %p141
    %p144 = scmp.ne.s32.totalorder %s129, %s143
    %p145 = scmp.eq.s32.totalorder %s21, 0
    %p146 = por %p144, %p145
    %s148 = sadd.s32 %s147, 1
    %p151 = scmp.eq.s32.totalorder %s15, 1
    %p152 = scmp.ne.s32.totalorder %s147, %s149
    %p153 = scmp.eq.s32.totalorder %s15, 0
    %p154 = por %p152, %p153
    %p155 = scmp.ne.s32.totalorder %s147, %s149
    %p156 = scmp.eq.s32.totalorder %s20, 1
    %p157 = por %p155, %p156
    %p158 = scmp.ne.s32.totalorder %s149, %s150
    %p159 = scmp.eq.s32.totalorder %s20, 0
    %p160 = por %p158, %p159
    %p161 = scmp.ne.s32.totalorder %s149, %s150
    %p162 = scmp.eq.s32.totalorder %s21, 1
    %p163 = por %p161, %p162
    %p165 = scmp.ne.s32.totalorder %s150, %s164
    %p166 = scmp.eq.s32.totalorder %s21, 0
    %p167 = por %p165, %p166
    %s169 = sadd.s32 %s168, 1
    %p172 = scmp.eq.s32.totalorder %s15, 1
    %p173 = scmp.ne.s32.totalorder %s168, %s170
    %p174 = scmp.eq.s32.totalorder %s15, 0
    %p175 = por %p173, %p174
    %p176 = scmp.ne.s32.totalorder %s168, %s170
    %p177 = scmp.eq.s32.totalorder %s20, 1
    %p178 = por %p176, %p177
    %p179 = scmp.ne.s32.totalorder %s170, %s171
    %p180 = scmp.eq.s32.totalorder %s20, 0
    %p181 = por %p179, %p180
    %p182 = scmp.ne.s32.totalorder %s170, %s171
    %p183 = scmp.eq.s32.totalorder %s21, 1
    %p184 = por %p182, %p183
    %p186 = scmp.ne.s32.totalorder %s171, %s185
    %p187 = scmp.eq.s32.totalorder %s21, 0
    %p188 = por %p186, %p187
    %s190 = sadd.s32 %s189, 1
    %p193 = scmp.eq.s32.totalorder %s15, 1
    %p194 = scmp.ne.s32.totalorder %s189, %s191
    %p195 = scmp.eq.s32.totalorder %s15, 0
    %p196 = por %p194, %p195
    %p197 = scmp.ne.s32.totalorder %s189, %s191
    %p198 = scmp.eq.s32.totalorder %s20, 1
    %p199 = por %p197, %p198
    %p200 = scmp.ne.s32.totalorder %s191, %s192
    %p201 = scmp.eq.s32.totalorder %s20, 0
    %p202 = por %p200, %p201
    %p203 = scmp.ne.s32.totalorder %s191, %s192
    %p204 = scmp.eq.s32.totalorder %s21, 1
    %p205 = por %p203, %p204
    %p207 = scmp.ne.s32.totalorder %s192, %s206
    %p208 = scmp.eq.s32.totalorder %s21, 0
    %p209 = por %p207, %p208
    %s211 = sadd.s32 %s210, 1
    %p214 = scmp.eq.s32.totalorder %s15, 1
    %p215 = scmp.ne.s32.totalorder %s210, %s212
    %p216 = scmp.eq.s32.totalorder %s15, 0
    %p217 = por %p215, %p216
    %p218 = scmp.ne.s32.totalorder %s210, %s212
    %p219 = scmp.eq.s32.totalorder %s20, 1
    %p220 = por %p218, %p219
    %p221 = scmp.ne.s32.totalorder %s212, %s213
    %p222 = scmp.eq.s32.totalorder %s20, 0
    %p223 = por %p221, %p222
    %p224 = scmp.ne.s32.totalorder %s212, %s213
    %p225 = scmp.eq.s32.totalorder %s21, 1
    %p226 = por %p224, %p225
    %p228 = scmp.ne.s32.totalorder %s213, %s227
    %p229 = scmp.eq.s32.totalorder %s21, 0
    %p230 = por %p228, %p229
    %s231 = ssub.s32 %s22, %s34
    %s232 = ssub.s32 %s23, %s30
    %s233 = sor.u32 %s231, %s232
    %p234 = scmp.eq.s32.totalorder %s233, 0
    %s236 = sadd.s32 %s235, 1
    %s237 = scalar_select %p234, %s235, %s236
    %p240 = pneg %p234
    %p241 = scmp.eq.s32.totalorder %s15, 1
    %p242 = por %p240, %p241
    %p243 = scmp.ne.s32.totalorder %s235, %s238
    %p244 = scmp.eq.s32.totalorder %s15, 0
    %p245 = por %p243, %p244
    %p246 = scmp.ne.s32.totalorder %s235, %s238
    %p247 = scmp.eq.s32.totalorder %s20, 1
    %p248 = por %p246, %p247
    %p249 = scmp.ne.s32.totalorder %s238, %s239
    %p250 = scmp.eq.s32.totalorder %s20, 0
    %p251 = por %p249, %p250
    %p252 = scmp.ne.s32.totalorder %s238, %s239
    %p253 = scmp.eq.s32.totalorder %s21, 1
    %p254 = por %p252, %p253
    %p256 = scmp.ne.s32.totalorder %s239, %s255
    %p257 = scmp.eq.s32.totalorder %s21, 0
    %p258 = por %p256, %p257
    %p259 = scmp.le.s32.totalorder 1, %s15
    %p260 = scmp.lt.s32.totalorder %s15, 3
    %p261 = pnand %p259, %p260
    %p262 = pneg %p261
    // Predicated region
    $region9: #{tpu_custom_call.1} parent=5 // pred_check
      _
    $region10: #{tpu_custom_call.1} parent=5 // pred_check_branch
      %264 = sbr.rel (%p261) target = $region12
    $region11: #{tpu_custom_call.1} parent=5 // pred_region
      %s265 = ssub.s32 %s15, 1
      // Predicated region
      $region13: #{tpu_custom_call.1} parent=11 // pred_check
        %p266 = pneg %p76
      $region14: #{tpu_custom_call.1} parent=11 // pred_check_branch
        %268 = sbr.rel (%p266) target = $region16
      $region15: #{tpu_custom_call.1} parent=11 // pred_region
        _
      $region16: #{tpu_custom_call.1} parent=11 // pred_fallthru
        _
      // Predicated region
      $region17: #{tpu_custom_call.1} parent=11 // pred_check
        %p269 = pneg %p97
      $region18: #{tpu_custom_call.1} parent=11 // pred_check_branch
        %271 = sbr.rel (%p269) target = $region20
      $region19: #{tpu_custom_call.1} parent=11 // pred_region
        _
      $region20: #{tpu_custom_call.1} parent=11 // pred_fallthru
        _
      // Predicated region
      $region21: #{tpu_custom_call.1} parent=11 // pred_check
        %p272 = pneg %p118
      $region22: #{tpu_custom_call.1} parent=11 // pred_check_branch
        %274 = sbr.rel (%p272) target = $region24
      $region23: #{tpu_custom_call.1} parent=11 // pred_region
        _
      $region24: #{tpu_custom_call.1} parent=11 // pred_fallthru
        _
      // Predicated region
      $region25: #{tpu_custom_call.1} parent=11 // pred_check
        %p275 = pneg %p139
      $region26: #{tpu_custom_call.1} parent=11 // pred_check_branch
        %277 = sbr.rel (%p275) target = $region28
      $region27: #{tpu_custom_call.1} parent=11 // pred_region
        _
      $region28: #{tpu_custom_call.1} parent=11 // pred_fallthru
        _
      // Predicated region
      $region29: #{tpu_custom_call.1} parent=11 // pred_check
        %p278 = pneg %p160
      $region30: #{tpu_custom_call.1} parent=11 // pred_check_branch
        %280 = sbr.rel (%p278) target = $region32
      $region31: #{tpu_custom_call.1} parent=11 // pred_region
        _
      $region32: #{tpu_custom_call.1} parent=11 // pred_fallthru
        _
      // Predicated region
      $region33: #{tpu_custom_call.1} parent=11 // pred_check
        %p281 = pneg %p181
      $region34: #{tpu_custom_call.1} parent=11 // pred_check_branch
        %283 = sbr.rel (%p281) target = $region36
      $region35: #{tpu_custom_call.1} parent=11 // pred_region
        _
      $region36: #{tpu_custom_call.1} parent=11 // pred_fallthru
        _
      // Predicated region
      $region37: #{tpu_custom_call.1} parent=11 // pred_check
        %p284 = pneg %p202
      $region38: #{tpu_custom_call.1} parent=11 // pred_check_branch
        %286 = sbr.rel (%p284) target = $region40
      $region39: #{tpu_custom_call.1} parent=11 // pred_region
        _
      $region40: #{tpu_custom_call.1} parent=11 // pred_fallthru
        _
      // Predicated region
      $region41: #{tpu_custom_call.1} parent=11 // pred_check
        %p287 = pneg %p223
      $region42: #{tpu_custom_call.1} parent=11 // pred_check_branch
        %289 = sbr.rel (%p287) target = $region44
      $region43: #{tpu_custom_call.1} parent=11 // pred_region
        _
      $region44: #{tpu_custom_call.1} parent=11 // pred_fallthru
        _
    $region12: #{tpu_custom_call.1} parent=5 // pred_fallthru
      _
    %p290 = scmp.lt.s32.totalorder %s15, 2
    // Predicated region
    $region45: #{tpu_custom_call.1} parent=5 // pred_check
      %p291 = pneg %p290
    $region46: #{tpu_custom_call.1} parent=5 // pred_check_branch
      %293 = sbr.rel (%p291) target = $region48
    $region47: #{tpu_custom_call.1} parent=5 // pred_region
      // Predicated region
      $region49: #{tpu_custom_call.1} parent=47 // pred_check
        %p294 = pneg %p49
      $region50: #{tpu_custom_call.1} parent=47 // pred_check_branch
        %296 = sbr.rel (%p294) target = $region52
      $region51: #{tpu_custom_call.1} parent=47 // pred_region
        %p297 = scmp.lt.s32.totalorder %s22, 1
        %s298 = scalar_select %p297, %s22, 1
        %p299 = scmp.lt.s32.totalorder %s23, 0
        %s300 = scalar_select %p299, %s23, 0
        %s301 = sadd.s32 %s300, %s298
        %s302 = smul.addr %s301, 4
        %s303 = scalar_lea.vmem %s0, %s302
      $region52: #{tpu_custom_call.1} parent=47 // pred_fallthru
        _
    $region48: #{tpu_custom_call.1} parent=5 // pred_fallthru
      _
    %p304 = scmp.le.s32.totalorder 1, %s15
    %p305 = scmp.lt.s32.totalorder %s15, 3
    %p306 = pnand %p304, %p305
    %p307 = pneg %p306
    // Predicated region
    $region53: #{tpu_custom_call.1} parent=5 // pred_check
      _
    $region54: #{tpu_custom_call.1} parent=5 // pred_check_branch
      %309 = sbr.rel (%p306) target = $region56
    $region55: #{tpu_custom_call.1} parent=5 // pred_region
      %s310 = ssub.s32 %s15, 1
      %p311 = scmp.lt.s32.totalorder %s24, 1
      %s312 = scalar_select %p311, %s24, 1
      %p313 = scmp.lt.s32.totalorder %s25, 0
      %s314 = scalar_select %p313, %s25, 0
      %s315 = sadd.s32 %s314, %s312
      %s316 = smul.addr %s315, 4
      %s317 = scalar_lea.vmem %s0, %s316
      %p318 = pneg %p55
      %p319 = pneg %p52
      %p320 = pneg %p76
      %p321 = pneg %p73
      %p322 = pneg %p97
      %p323 = pneg %p94
      %p324 = pneg %p118
      %p325 = pneg %p115
      %p326 = pneg %p139
      %p327 = pneg %p136
      %p328 = pneg %p160
      %p329 = pneg %p157
      %p330 = pneg %p181
      %p331 = pneg %p178
      %p332 = pneg %p202
      %p333 = pneg %p199
      %p334 = pneg %p223
      %p335 = pneg %p220
      %p336 = pneg %p251
      %p337 = pneg %p248
      %p338 = scmp.lt.s32.totalorder %s24, 1
      %s339 = scalar_select %p338, %s24, 1
      %p340 = scmp.lt.s32.totalorder %s25, 0
      %s341 = scalar_select %p340, %s25, 0
      %s342 = sadd.s32 %s341, %s339
      %s343 = smul.addr %s342, 8
      %s344 = scalar_lea.vmem %s9, %s343
      %p345 = scmp.lt.s32.totalorder %s24, 1
      %s346 = scalar_select %p345, %s24, 1
      %p347 = scmp.lt.s32.totalorder %s25, 0
      %s348 = scalar_select %p347, %s25, 0
      %s349 = sadd.s32 %s348, %s346
      %s350 = smul.addr %s349, 4
      %s351 = scalar_lea.vmem %s0, %s350
      %p352 = scmp.lt.s32.totalorder %s24, 1
      %s353 = scalar_select %p352, %s24, 1
      %p354 = scmp.lt.s32.totalorder %s25, 0
      %s355 = scalar_select %p354, %s25, 0
      %s356 = sadd.s32 %s355, %s353
      %s357 = smul.addr %s356, 8
      %s358 = scalar_lea.vmem %s9, %s357
      %v359 = vld [vmem:[%s351] sm:$0xf]
      %v360 = vld [vmem:[%s1] sm:$0xff]
      %v361 = vld [vmem:[%s1 + $0x8] sm:$0xff]
      %v362 = vld [vmem:[%s1 + $0x10] sm:$0xff]
      %v363 = vld [vmem:[%s1 + $0x18] sm:$0xff]
      %v364 = vld [vmem:[%s2] sm:$0xff]
      %v365 = vld [vmem:[%s2 + $0x8] sm:$0xff]
      %v366 = vld [vmem:[%s2 + $0x10] sm:$0xff]
      %v367 = vld [vmem:[%s2 + $0x18] sm:$0xff]
      %369 = vset.pattern.permute.xlu0 0
      %370 = vperm.xlu0 %369, %v364
      %v371 = vpop.permute.xlu0 %370
      %374 = vset.pattern.permute.xlu0 0
      %375 = vperm.xlu0 %374, %v365
      %v376 = vpop.permute.xlu0 %375
      %379 = vset.pattern.permute.xlu0 0
      %380 = vperm.xlu0 %379, %v366
      %v381 = vpop.permute.xlu0 %380
      %384 = vset.pattern.permute.xlu0 0
      %385 = vperm.xlu0 %384, %v367
      %v386 = vpop.permute.xlu0 %385
      %vm388 = vcmask 31744
      %v390 = vsel %vm388, %v360, 0
      %v393 = vsel %vm388, %v361, 0
      %v396 = vsel %vm388, %v362, 0
      %v399 = vsel %vm388, %v363, 0
      %vm401 = vcmask 1043456
      %v403 = vsel %vm401, %v359, 0
      %405 = vmatpush.msra.mxu0 0.0
      %406 = vmatpush.msra.mxu0 0.0
      %407 = vmatpush.msra.mxu0 0.0
      %408 = vmatpush.msra.mxu0 0.0
      %409 = vmatpush.msra.mxu0 0.0
      %410 = vmatpush.msra.mxu0 0.0
      %411 = vmatpush.msra.mxu0 0.0
      %412 = vmatpush.msra.mxu0 0.0
      %413 = vmatpush.msra.mxu0 0.0
      %414 = vmatpush.msra.mxu0 0.0
      %415 = vmatpush.msra.mxu0 0.0
      %416 = vmatpush.msra.mxu0 0.0
      %417 = vmatpush.msra.mxu0 0.0
      %418 = vmatpush.msra.mxu0 0.0
      %419 = vmatpush.msra.mxu0 0.0
      %420 = vmatpush.msra.mxu0 %v403
      %421 = vmatmul.f32.gmra.mxu0 %v390
      %v422 = vpop.f32.mrf.mxu0
      %v423 = vadd.f32 %v371, %v422
      %424 = vmatmul.f32.gmra.mxu0 %v393
      %v425 = vpop.f32.mrf.mxu0
      %v426 = vadd.f32 %v376, %v425
      %427 = vmatmul.f32.gmra.mxu0 %v396
      %v428 = vpop.f32.mrf.mxu0
      %v429 = vadd.f32 %v381, %v428
      %430 = vmatmul.f32.gmra.mxu0 %v399
      %v431 = vpop.f32.mrf.mxu0
      %v432 = vadd.f32 %v386, %v431
      %433 = vdwg.mxu0
      %v434 = vld [vmem:[%s3] sm:$0xff]
      %v435 = vld [vmem:[%s3 + $0x8] sm:$0xff]
      %v436 = vld [vmem:[%s3 + $0x10] sm:$0xff]
      %v437 = vld [vmem:[%s3 + $0x18] sm:$0xff]
      %v438 = vld [vmem:[%s4] sm:$0xff]
      %v439 = vld [vmem:[%s4 + $0x8] sm:$0xff]
      %v440 = vld [vmem:[%s4 + $0x10] sm:$0xff]
      %v441 = vld [vmem:[%s4 + $0x18] sm:$0xff]
      %443 = vset.pattern.permute.xlu0 0
      %444 = vperm.xlu0 %443, %v438
      %v445 = vpop.permute.xlu0 %444
      %448 = vset.pattern.permute.xlu0 0
      %449 = vperm.xlu0 %448, %v439
      %v450 = vpop.permute.xlu0 %449
      %453 = vset.pattern.permute.xlu0 0
      %454 = vperm.xlu0 %453, %v440
      %v455 = vpop.permute.xlu0 %454
      %458 = vset.pattern.permute.xlu0 0
      %459 = vperm.xlu0 %458, %v441
      %v460 = vpop.permute.xlu0 %459
      %vm462 = vcmask 261120
      %v464 = vsel %vm462, %v434, 0
      %v467 = vsel %vm462, %v435, 0
      %v470 = vsel %vm462, %v436, 0
      %v473 = vsel %vm462, %v437, 0
      %475 = vmatpush.msra.mxu0 0.0
      %476 = vmatpush.msra.mxu0 0.0
      %477 = vmatpush.msra.mxu0 0.0
      %478 = vmatpush.msra.mxu0 0.0
      %479 = vmatpush.msra.mxu0 0.0
      %480 = vmatpush.msra.mxu0 0.0
      %481 = vmatpush.msra.mxu0 0.0
      %482 = vmatpush.msra.mxu0 0.0
      %483 = vmatpush.msra.mxu0 0.0
      %484 = vmatpush.msra.mxu0 0.0
      %485 = vmatpush.msra.mxu0 0.0
      %486 = vmatpush.msra.mxu0 0.0
      %487 = vmatpush.msra.mxu0 %v432
      %488 = vmatpush.msra.mxu0 %v429
      %489 = vmatpush.msra.mxu0 %v426
      %490 = vmatpush.msra.mxu0 %v423
      %491 = vmatmul.f32.gmra.mxu0 %v464
      %v492 = vpop.f32.mrf.mxu0
      %v493 = vadd.f32 %v445, %v492
      %494 = vmatmul.f32.gmra.mxu0 %v467
      %v495 = vpop.f32.mrf.mxu0
      %v496 = vadd.f32 %v450, %v495
      %497 = vmatmul.f32.gmra.mxu0 %v470
      %v498 = vpop.f32.mrf.mxu0
      %v499 = vadd.f32 %v455, %v498
      %500 = vmatmul.f32.gmra.mxu0 %v473
      %v501 = vpop.f32.mrf.mxu0
      %v502 = vadd.f32 %v460, %v501
      %503 = vdwg.mxu0
      %v504 = vmax.f32 %v493, 0.0
      %v505 = vmax.f32 %v496, 0.0
      %v506 = vmax.f32 %v499, 0.0
      %v507 = vmax.f32 %v502, 0.0
      %v508 = vld [vmem:[%s5] sm:$0xff]
      %v509 = vld [vmem:[%s5 + $0x8] sm:$0xff]
      %v510 = vld [vmem:[%s5 + $0x10] sm:$0xff]
      %v511 = vld [vmem:[%s5 + $0x18] sm:$0xff]
      %v512 = vld [vmem:[%s6] sm:$0xff]
      %v513 = vld [vmem:[%s6 + $0x8] sm:$0xff]
      %v514 = vld [vmem:[%s6 + $0x10] sm:$0xff]
      %v515 = vld [vmem:[%s6 + $0x18] sm:$0xff]
      %517 = vset.pattern.permute.xlu0 0
      %518 = vperm.xlu0 %517, %v512
      %v519 = vpop.permute.xlu0 %518
      %522 = vset.pattern.permute.xlu0 0
      %523 = vperm.xlu0 %522, %v513
      %v524 = vpop.permute.xlu0 %523
      %527 = vset.pattern.permute.xlu0 0
      %528 = vperm.xlu0 %527, %v514
      %v529 = vpop.permute.xlu0 %528
      %532 = vset.pattern.permute.xlu0 0
      %533 = vperm.xlu0 %532, %v515
      %v534 = vpop.permute.xlu0 %533
      %v537 = vsel %vm462, %v508, 0
      %v540 = vsel %vm462, %v509, 0
      %v543 = vsel %vm462, %v510, 0
      %v546 = vsel %vm462, %v511, 0
      %548 = vmatpush.msra.mxu0 0.0
      %549 = vmatpush.msra.mxu0 0.0
      %550 = vmatpush.msra.mxu0 0.0
      %551 = vmatpush.msra.mxu0 0.0
      %552 = vmatpush.msra.mxu0 0.0
      %553 = vmatpush.msra.mxu0 0.0
      %554 = vmatpush.msra.mxu0 0.0
      %555 = vmatpush.msra.mxu0 0.0
      %556 = vmatpush.msra.mxu0 0.0
      %557 = vmatpush.msra.mxu0 0.0
      %558 = vmatpush.msra.mxu0 0.0
      %559 = vmatpush.msra.mxu0 0.0
      %560 = vmatpush.msra.mxu0 %v507
      %561 = vmatpush.msra.mxu0 %v506
      %562 = vmatpush.msra.mxu0 %v505
      %563 = vmatpush.msra.mxu0 %v504
      %564 = vmatmul.f32.gmra.mxu0 %v537
      %v565 = vpop.f32.mrf.mxu0
      %v566 = vadd.f32 %v519, %v565
      %567 = vmatmul.f32.gmra.mxu0 %v540
      %v568 = vpop.f32.mrf.mxu0
      %v569 = vadd.f32 %v524, %v568
      %570 = vmatmul.f32.gmra.mxu0 %v543
      %v571 = vpop.f32.mrf.mxu0
      %v572 = vadd.f32 %v529, %v571
      %573 = vmatmul.f32.gmra.mxu0 %v546
      %v574 = vpop.f32.mrf.mxu0
      %v575 = vadd.f32 %v534, %v574
      %576 = vdwg.mxu0
      %v577 = vmax.f32 %v566, 0.0
      %v578 = vmax.f32 %v569, 0.0
      %v579 = vmax.f32 %v572, 0.0
      %v580 = vmax.f32 %v575, 0.0
      %v581 = vadd.f32 %v423, %v577
      %v582 = vadd.f32 %v426, %v578
      %v583 = vadd.f32 %v429, %v579
      %v584 = vadd.f32 %v432, %v580
      %s585 = scalar_lea.vmem %s3, 32
      %v586 = vld [vmem:[%s585] sm:$0xff]
      %v587 = vld [vmem:[%s585 + $0x8] sm:$0xff]
      %v588 = vld [vmem:[%s585 + $0x10] sm:$0xff]
      %v589 = vld [vmem:[%s585 + $0x18] sm:$0xff]
      %s590 = scalar_lea.vmem %s4, 32
      %v591 = vld [vmem:[%s590] sm:$0xff]
      %v592 = vld [vmem:[%s590 + $0x8] sm:$0xff]
      %v593 = vld [vmem:[%s590 + $0x10] sm:$0xff]
      %v594 = vld [vmem:[%s590 + $0x18] sm:$0xff]
      %596 = vset.pattern.permute.xlu0 0
      %597 = vperm.xlu0 %596, %v591
      %v598 = vpop.permute.xlu0 %597
      %601 = vset.pattern.permute.xlu0 0
      %602 = vperm.xlu0 %601, %v592
      %v603 = vpop.permute.xlu0 %602
      %606 = vset.pattern.permute.xlu0 0
      %607 = vperm.xlu0 %606, %v593
      %v608 = vpop.permute.xlu0 %607
      %611 = vset.pattern.permute.xlu0 0
      %612 = vperm.xlu0 %611, %v594
      %v613 = vpop.permute.xlu0 %612
      %v616 = vsel %vm462, %v586, 0
      %v619 = vsel %vm462, %v587, 0
      %v622 = vsel %vm462, %v588, 0
      %v625 = vsel %vm462, %v589, 0
      %627 = vmatpush.msra.mxu0 0.0
      %628 = vmatpush.msra.mxu0 0.0
      %629 = vmatpush.msra.mxu0 0.0
      %630 = vmatpush.msra.mxu0 0.0
      %631 = vmatpush.msra.mxu0 0.0
      %632 = vmatpush.msra.mxu0 0.0
      %633 = vmatpush.msra.mxu0 0.0
      %634 = vmatpush.msra.mxu0 0.0
      %635 = vmatpush.msra.mxu0 0.0
      %636 = vmatpush.msra.mxu0 0.0
      %637 = vmatpush.msra.mxu0 0.0
      %638 = vmatpush.msra.mxu0 0.0
      %639 = vmatpush.msra.mxu0 %v584
      %640 = vmatpush.msra.mxu0 %v583
      %641 = vmatpush.msra.mxu0 %v582
      %642 = vmatpush.msra.mxu0 %v581
      %643 = vmatmul.f32.gmra.mxu0 %v616
      %v644 = vpop.f32.mrf.mxu0
      %v645 = vadd.f32 %v598, %v644
      %646 = vmatmul.f32.gmra.mxu0 %v619
      %v647 = vpop.f32.mrf.mxu0
      %v648 = vadd.f32 %v603, %v647
      %649 = vmatmul.f32.gmra.mxu0 %v622
      %v650 = vpop.f32.mrf.mxu0
      %v651 = vadd.f32 %v608, %v650
      %652 = vmatmul.f32.gmra.mxu0 %v625
      %v653 = vpop.f32.mrf.mxu0
      %v654 = vadd.f32 %v613, %v653
      %655 = vdwg.mxu0
      %v656 = vmax.f32 %v645, 0.0
      %v657 = vmax.f32 %v648, 0.0
      %v658 = vmax.f32 %v651, 0.0
      %v659 = vmax.f32 %v654, 0.0
      %s660 = scalar_lea.vmem %s5, 32
      %v661 = vld [vmem:[%s660] sm:$0xff]
      %v662 = vld [vmem:[%s660 + $0x8] sm:$0xff]
      %v663 = vld [vmem:[%s660 + $0x10] sm:$0xff]
      %v664 = vld [vmem:[%s660 + $0x18] sm:$0xff]
      %s665 = scalar_lea.vmem %s6, 32
      %v666 = vld [vmem:[%s665] sm:$0xff]
      %v667 = vld [vmem:[%s665 + $0x8] sm:$0xff]
      %v668 = vld [vmem:[%s665 + $0x10] sm:$0xff]
      %v669 = vld [vmem:[%s665 + $0x18] sm:$0xff]
      %671 = vset.pattern.permute.xlu0 0
      %672 = vperm.xlu0 %671, %v666
      %v673 = vpop.permute.xlu0 %672
      %676 = vset.pattern.permute.xlu0 0
      %677 = vperm.xlu0 %676, %v667
      %v678 = vpop.permute.xlu0 %677
      %681 = vset.pattern.permute.xlu0 0
      %682 = vperm.xlu0 %681, %v668
      %v683 = vpop.permute.xlu0 %682
      %686 = vset.pattern.permute.xlu0 0
      %687 = vperm.xlu0 %686, %v669
      %v688 = vpop.permute.xlu0 %687
      %v691 = vsel %vm462, %v661, 0
      %v694 = vsel %vm462, %v662, 0
      %v697 = vsel %vm462, %v663, 0
      %v700 = vsel %vm462, %v664, 0
      %702 = vmatpush.msra.mxu0 0.0
      %703 = vmatpush.msra.mxu0 0.0
      %704 = vmatpush.msra.mxu0 0.0
      %705 = vmatpush.msra.mxu0 0.0
      %706 = vmatpush.msra.mxu0 0.0
      %707 = vmatpush.msra.mxu0 0.0
      %708 = vmatpush.msra.mxu0 0.0
      %709 = vmatpush.msra.mxu0 0.0
      %710 = vmatpush.msra.mxu0 0.0
      %711 = vmatpush.msra.mxu0 0.0
      %712 = vmatpush.msra.mxu0 0.0
      %713 = vmatpush.msra.mxu0 0.0
      %714 = vmatpush.msra.mxu0 %v659
      %715 = vmatpush.msra.mxu0 %v658
      %716 = vmatpush.msra.mxu0 %v657
      %717 = vmatpush.msra.mxu0 %v656
      %718 = vmatmul.f32.gmra.mxu0 %v691
      %v719 = vpop.f32.mrf.mxu0
      %v720 = vadd.f32 %v673, %v719
      %721 = vmatmul.f32.gmra.mxu0 %v694
      %v722 = vpop.f32.mrf.mxu0
      %v723 = vadd.f32 %v678, %v722
      %724 = vmatmul.f32.gmra.mxu0 %v697
      %v725 = vpop.f32.mrf.mxu0
      %v726 = vadd.f32 %v683, %v725
      %727 = vmatmul.f32.gmra.mxu0 %v700
      %v728 = vpop.f32.mrf.mxu0
      %v729 = vadd.f32 %v688, %v728
      %730 = vdwg.mxu0
      %v731 = vmax.f32 %v720, 0.0
      %v732 = vmax.f32 %v723, 0.0
      %v733 = vmax.f32 %v726, 0.0
      %v734 = vmax.f32 %v729, 0.0
      %v735 = vadd.f32 %v581, %v731
      %v736 = vadd.f32 %v582, %v732
      %v737 = vadd.f32 %v583, %v733
      %v738 = vadd.f32 %v584, %v734
      %v739 = vld [vmem:[%s7] sm:$0x3f]
      %v740 = vld [vmem:[%s8] sm:$0x3f]
      %742 = vset.pattern.permute.xlu0 0
      %743 = vperm.xlu0 %742, %v740
      %v744 = vpop.permute.xlu0 %743
      %v747 = vsel %vm462, %v739, 0
      %749 = vmatpush.msra.mxu0 0.0
      %750 = vmatpush.msra.mxu0 0.0
      %751 = vmatpush.msra.mxu0 0.0
      %752 = vmatpush.msra.mxu0 0.0
      %753 = vmatpush.msra.mxu0 0.0
      %754 = vmatpush.msra.mxu0 0.0
      %755 = vmatpush.msra.mxu0 0.0
      %756 = vmatpush.msra.mxu0 0.0
      %757 = vmatpush.msra.mxu0 0.0
      %758 = vmatpush.msra.mxu0 0.0
      %759 = vmatpush.msra.mxu0 0.0
      %760 = vmatpush.msra.mxu0 0.0
      %761 = vmatpush.msra.mxu0 %v738
      %762 = vmatpush.msra.mxu0 %v737
      %763 = vmatpush.msra.mxu0 %v736
      %764 = vmatpush.msra.mxu0 %v735
      %765 = vmatmul.f32.gmra.mxu0 %v747
      %v766 = vpop.f32.mrf.mxu0
      %v767 = vadd.f32 %v744, %v766
      %768 = vdwg.mxu0
      %vm769 = vcmask 128000
      %770 = vst.msk [vmem:[%s358] sm:$0x3f] %vm769, %v767
      %p771 = scmp.lt.s32.totalorder %s24, 1
      %s772 = scalar_select %p771, %s24, 1
      %p773 = scmp.lt.s32.totalorder %s25, 0
      %s774 = scalar_select %p773, %s25, 0
      %s775 = sadd.s32 %s774, %s772
      %s776 = smul.addr %s775, 8
      %s777 = scalar_lea.vmem %s9, %s776
      // Predicated region
      $region57: #{tpu_custom_call.1} parent=55 // pred_check
        %p778 = pneg %p248
      $region58: #{tpu_custom_call.1} parent=55 // pred_check_branch
        %780 = sbr.rel (%p778) target = $region60
      $region59: #{tpu_custom_call.1} parent=55 // pred_region
        _
      $region60: #{tpu_custom_call.1} parent=55 // pred_fallthru
        _
    $region56: #{tpu_custom_call.1} parent=5 // pred_fallthru
      _
    %p781 = scmp.le.s32.totalorder 2, %s15
    // Predicated region
    $region61: #{tpu_custom_call.1} parent=5 // pred_check
      %p782 = pneg %p781
    $region62: #{tpu_custom_call.1} parent=5 // pred_check_branch
      %784 = sbr.rel (%p782) target = $region64
    $region63: #{tpu_custom_call.1} parent=5 // pred_region
      %s785 = ssub.s32 %s15, 2
      // Predicated region
      $region65: #{tpu_custom_call.1} parent=63 // pred_check
        %p786 = pneg %p254
      $region66: #{tpu_custom_call.1} parent=63 // pred_check_branch
        %788 = sbr.rel (%p786) target = $region68
      $region67: #{tpu_custom_call.1} parent=63 // pred_region
        %p789 = scmp.lt.s32.totalorder %s26, 1
        %s790 = scalar_select %p789, %s26, 1
        %p791 = scmp.lt.s32.totalorder %s27, 0
        %s792 = scalar_select %p791, %s27, 0
        %s793 = sadd.s32 %s792, %s790
        %s794 = smul.addr %s793, 8
        %s795 = scalar_lea.vmem %s9, %s794
      $region68: #{tpu_custom_call.1} parent=63 // pred_fallthru
        _
    $region64: #{tpu_custom_call.1} parent=5 // pred_fallthru
      _
  $region6: #{tpu_custom_call.1} parent=0 // loop_footer
    %s19 = sadd.s32 1, %s15
  $region7: #{tpu_custom_call.1} parent=0 // loop_footer_branch
    %14 = sbr.rel target = $region3
  $region8: #{tpu_custom_call.1} parent=0 // loop_exit
    _

</llo_original>
